<compile_context>
chip_gen: v7x
topology: tpu7x:2x2x1
jax: 0.10.0
libtpu: 0.0.40
codegen_flags: <defaults>
</compile_context>

<pallas_src>
import functools

import numpy as np
import jax
import jax.numpy as jnp
from jax.experimental import pallas as pl
from jax.experimental.pallas import tpu as pltpu

EPS = float(np.finfo(np.float32).eps)


def _elementflow_kernel(x_ref, fz_ref, ld_ref, *, nb, C):
    # x_ref / fz_ref: (nb*C, tile)  -- rows = batch*channel (sublane-packed),
    #                                  lanes = flattened spatial tile.
    # ld_ref:         (nb, tile)
    x = x_ref[...]
    t = jnp.tanh(x)
    fz_ref[...] = t.astype(fz_ref.dtype)

    # d/dx tanh(x) = 1 - tanh(x)^2  is in [0, 1]  ->  abs() is a no-op.
    logd = jnp.log((1.0 - t * t) + EPS)

    # Channel reduction: rows [b*C, (b+1)*C) of logd -> row b of the log-det.
    parts = [
        jnp.sum(logd[b * C:(b + 1) * C, :], axis=0, keepdims=True)
        for b in range(nb)
    ]
    ld = parts[0] if nb == 1 else jnp.concatenate(parts, axis=0)
    ld_ref[...] = ld.astype(ld_ref.dtype)


def _pick_batch_block(N):
    # The (nb, tile) log-det block must have nb == N (full dim) or nb % 8 == 0.
    if N <= 8:
        return N
    for nb in (32, 16, 8):
        if N % nb == 0:
            return nb
    return N


def _pick_spatial_tile(S, desired):
    # tile must be a multiple of 128 or equal to the full spatial extent S.
    if S <= desired:
        return S
    t = (desired // 128) * 128
    while t >= 128:
        if S % t == 0:
            return t
        t -= 128
    return S  # degenerate fallback: one block spanning all of S


def element_flow(x, *, desired_tile=1024):
    """x: (N, C, H, W) float32 -> (f_z (N,C,H,W), log_abs_det_jacobian (N,H,W))."""
    N, C, H, W = x.shape
    S = H * W

    nb = _pick_batch_block(N)
    rows = nb * C

    # Bound the lane tile so the double-buffered per-step footprint stays far
    # below the smallest per-generation VMEM (v7x: 64 MiB physical, ~48 usable).
    max_tile_by_vmem = max(128, ((8 * 1024 * 1024) // (rows * 4)) // 128 * 128)
    tile = _pick_spatial_tile(S, min(desired_tile, max_tile_by_vmem))

    # Per grid step: x-in + fz-out (double-buffered) + ld-out (double-buffered).
    per_step = 2 * (2 * rows * tile * 4 + nb * tile * 4)
    vmem_limit = int(min(48 * 2**20, max(16 * 2**20, 2 * per_step)))

    x_flat = x.reshape(N * C, S)
    kernel = functools.partial(_elementflow_kernel, nb=nb, C=C)

    fz_flat, ld_flat = pl.pallas_call(
        kernel,
        out_shape=(
            jax.ShapeDtypeStruct((N * C, S), x.dtype),
            jax.ShapeDtypeStruct((N, S), x.dtype),
        ),
        grid_spec=pltpu.PrefetchScalarGridSpec(
            num_scalar_prefetch=0,
            grid=(N // nb, S // tile),
            in_specs=[
                pl.BlockSpec((rows, tile), lambda b, s: (b, s)),
            ],
            out_specs=[
                pl.BlockSpec((rows, tile), lambda b, s: (b, s)),
                pl.BlockSpec((nb, tile), lambda b, s: (b, s)),
            ],
        ),
        compiler_params=pltpu.CompilerParams(
            dimension_semantics=("parallel", "parallel"),
            vmem_limit_bytes=vmem_limit,
        ),
        cost_estimate=pl.CostEstimate(
            flops=6 * N * C * S,
            transcendentals=2 * N * C * S,
            bytes_accessed=4 * (2 * N * C * S + N * S),
        ),
    )(x_flat)

    return fz_flat.reshape(N, C, H, W), ld_flat.reshape(N, H, W)


def _reference(x):
    f_z = jnp.tanh(x)
    der = 1.0 - jnp.tanh(x) ** 2
    logdet = jnp.sum(jnp.log(jnp.abs(der) + EPS), axis=1)
    return f_z, logdet


if __name__ == "__main__":
    key = jax.random.PRNGKey(0)
    N, C, H, W = 2, 4, 16, 16
    x = jax.random.normal(key, (N, C, H, W), dtype=jnp.float32)

    f_z, logdet = element_flow(x)
    jax.block_until_ready((f_z, logdet))

    f_ref, ld_ref = _reference(x)
    assert f_z.shape == (N, C, H, W)
    assert logdet.shape == (N, H, W)
    np.testing.assert_allclose(np.asarray(f_z), np.asarray(f_ref), rtol=1e-6, atol=1e-6)
    np.testing.assert_allclose(np.asarray(logdet), np.asarray(ld_ref), rtol=1e-5, atol=1e-5)

    print("KERNEL_OK")
</pallas_src>

<mosaic_0001>
module attributes {stable_mosaic.version = 11 : i64} {
  func.func @_elementflow_kernel(%arg0: i32, %arg1: i32, %arg2: memref<8x256xf32, #tpu.memory_space<vmem>>, %arg3: memref<8x256xf32, #tpu.memory_space<vmem>>, %arg4: memref<2x256xf32, #tpu.memory_space<vmem>>) attributes {dimension_semantics = [#tpu.dimension_semantics<parallel>, #tpu.dimension_semantics<parallel>], iteration_bounds = array<i64: 1, 1>, scalar_prefetch = 0 : i64, scratch_operands = 0 : i64, tpu.core_type = #tpu.core_type<tc>, window_params = [{transform_indices = @transform_0, window_bounds = array<i64: 8, 256>}, {transform_indices = @transform_1, window_bounds = array<i64: 8, 256>}, {transform_indices = @transform_2, window_bounds = array<i64: 2, 256>}]} {
    %c0 = arith.constant 0 : index
    %c0_0 = arith.constant 0 : index
    %0 = vector.load %arg2[%c0, %c0_0] : memref<8x256xf32, #tpu.memory_space<vmem>>, vector<8x256xf32>
    %1 = math.tanh %0 : vector<8x256xf32>
    %c0_1 = arith.constant 0 : index
    %c0_2 = arith.constant 0 : index
    %2 = vector.load %arg3[%c0_1, %c0_2] : memref<8x256xf32, #tpu.memory_space<vmem>>, vector<8x256xf32>
    tpu.vector_store %arg3[%c0_1, %c0_2], %1 {strides = array<i32>} : memref<8x256xf32, #tpu.memory_space<vmem>>, vector<8x256xf32>,
    %3 = arith.mulf %1, %1 : vector<8x256xf32>
    %cst = arith.constant 1.000000e+00 : f32
    %4 = vector.broadcast %cst : f32 to vector<8x256xf32>
    %5 = arith.subf %4, %3 : vector<8x256xf32>
    %cst_3 = arith.constant 1.1920929E-7 : f32
    %6 = vector.broadcast %cst_3 : f32 to vector<8x256xf32>
    %7 = arith.addf %5, %6 : vector<8x256xf32>
    %8 = math.log %7 : vector<8x256xf32>
    %9 = vector.extract_strided_slice %8 {offsets = [0, 0], sizes = [4, 256], strides = [1, 1]} : vector<8x256xf32> to vector<4x256xf32>
    %cst_4 = arith.constant dense<0.000000e+00> : vector<256xf32>
    %10 = vector.multi_reduction <add>, %9, %cst_4 [0] : vector<4x256xf32> to vector<256xf32>
    %11 = vector.shape_cast %10 : vector<256xf32> to vector<1x256xf32>
    %12 = vector.extract_strided_slice %8 {offsets = [4, 0], sizes = [4, 256], strides = [1, 1]} : vector<8x256xf32> to vector<4x256xf32>
    %cst_5 = arith.constant dense<0.000000e+00> : vector<256xf32>
    %13 = vector.multi_reduction <add>, %12, %cst_5 [0] : vector<4x256xf32> to vector<256xf32>
    %14 = vector.shape_cast %13 : vector<256xf32> to vector<1x256xf32>
    %15 = tpu.concatenate %11, %14 in 0 : vector<1x256xf32>, vector<1x256xf32> -> vector<2x256xf32>
    %c0_6 = arith.constant 0 : index
    %c0_7 = arith.constant 0 : index
    %16 = vector.load %arg4[%c0_6, %c0_7] : memref<2x256xf32, #tpu.memory_space<vmem>>, vector<2x256xf32>
    tpu.vector_store %arg4[%c0_6, %c0_7], %15 {strides = array<i32>} : memref<2x256xf32, #tpu.memory_space<vmem>>, vector<2x256xf32>,
    return
  }
  func.func @transform_0(%arg0: i32, %arg1: i32) -> (i32, i32) {
    %c0_i32 = arith.constant 0 : i32
    return %arg0, %arg1 : i32, i32
  }
  func.func @transform_1(%arg0: i32, %arg1: i32) -> (i32, i32) {
    %c0_i32 = arith.constant 0 : i32
    return %arg0, %arg1 : i32, i32
  }
  func.func @transform_2(%arg0: i32, %arg1: i32) -> (i32, i32) {
    %c0_i32 = arith.constant 0 : i32
    return %arg0, %arg1 : i32, i32
  }
}

</mosaic_0001>

<llo_original>
// kernel: tpu_custom_call.1
$region0: #{tpu_custom_call.1}
  #allocation0 [shape = 'u32[]', space=smem, size = 0x4, offset = 0x4, fixed_abs, tag = 'smem constant byte address 0x4 - core index']
  #allocation1 [shape = 'u32[144,128]{1,0:T(1,128)}', space=vmem, size = 0x12000, scoped, tag = 'internal scratch']
  %s0 = inlined_call_operand.hbm [shape: f32[8,256], index: 0, kind: input, shape index: {}]
  %s1 = inlined_call_operand.hbm [shape: f32[8,256], index: 1, kind: output, shape index: {0}]
  %s2 = inlined_call_operand.hbm [shape: f32[2,256], index: 2, kind: output, shape index: {1}]
  %3 = xla_tuple %s1, %s2
  %s4 = sld [smem:[#allocation0]]
  $region26: #{tpu_custom_call.1} parent=0
    _
  %s6 = ssub.s32 1, %s4
  %s7 = scalar_select 0, %s6, %s4
  $region1: #{tpu_custom_call.1} parent=0
    #allocation2 [shape = 'u8[8192]{0}', space=vmem, size = 0x2000, scoped, tag = 'input window, operand 0, single buffered']
    #allocation3 [shape = 's32[1]{0}', space=sflag, size = 0x4, scoped, tag = 'scoped memory for tpu_custom_call.1']
    #allocation4 [shape = 's32[1]{0}', space=sflag, size = 0x4, scoped, tag = 'scoped memory for tpu_custom_call.1']
    #allocation5 [shape = 'u8[8192]{0}', space=vmem, size = 0x2000, scoped, tag = 'output window, operand 0, single buffered']
    #allocation6 [shape = 'u8[2048]{0}', space=vmem, size = 0x800, scoped, tag = 'output window, operand 1, single buffered']
    #allocation7 [shape = 's32[1]{0}', space=sflag, size = 0x4, scoped, tag = 'scoped memory for tpu_custom_call.1']
    %8 = vsyncpa [#allocation3], 0
    %9 = vsyncpa [#allocation4], 0
    %10 = vsyncpa [#allocation7], 0
    // Predicated region
    $region2: #{tpu_custom_call.1} parent=1 // pred_check
      _
    $region3: #{tpu_custom_call.1} parent=1 // pred_check_branch
      %12 = sbr.rel (0) target = $region5
    $region4: #{tpu_custom_call.1} parent=1 // pred_region
      %s14 = ssub.s32 256, 256
      %15 = vsyncadd [#allocation3], %s14
      %s17 = sshll.u32 [#allocation2], 4
      %s18 = int_to_ptr.vmem [resolvable:$true] %s17
      %20 = dma.hbm_to_vmem [thread:$0]  %s0, 256, %s18, [#allocation3]
    $region5: #{tpu_custom_call.1} parent=1 // pred_fallthru
      _
    // Predicated region
    $region6: #{tpu_custom_call.1} parent=1 // pred_check
      _
    $region7: #{tpu_custom_call.1} parent=1 // pred_check_branch
      %22 = sbr.rel (0) target = $region9
    $region8: #{tpu_custom_call.1} parent=1 // pred_region
      %23 = dma.done [#allocation3], 256
    $region9: #{tpu_custom_call.1} parent=1 // pred_fallthru
      _
    %v24 = vld [vmem:[#allocation2] sm:$0xff]
    %v25 = vld [vmem:[#allocation2 + $0x8] sm:$0xff]
    %v26 = vtanh.pop %v24
    %v27 = vtanh.pop %v25
    %28 = vst [vmem:[#allocation5] sm:$0xff] %v26
    %29 = vst [vmem:[#allocation5 + $0x8] sm:$0xff] %v27
    %v30 = vmul.f32 %v26, %v26
    %v31 = vmul.f32 %v27, %v27
    %v32 = vsub.f32 1.0, %v30
    %v33 = vsub.f32 1.0, %v31
    %v34 = vadd.f32 %v32, 1.1920929e-07
    %v35 = vadd.f32 %v33, 1.1920929e-07
    %v36 = vlog2.pop %v34
    %v37 = vmul.f32 %v36, 0.6931472
    %v38 = vlog2.pop %v35
    %v39 = vmul.f32 %v38, 0.6931472
    %vm40 = vcmask 1043456
    %v41 = vsel %vm40, %v37, 0.0
    %v42 = vrot.slane %v41, 4
    %v43 = vadd.f32 %v41, %v42
    %v44 = vrot.slane %v43, 2
    %v45 = vadd.f32 %v43, %v44
    %v46 = vrot.slane %v45, 1
    %v47 = vadd.f32 %v45, %v46
    %v48 = vsel %vm40, %v39, 0.0
    %v49 = vrot.slane %v48, 4
    %v50 = vadd.f32 %v48, %v49
    %v51 = vrot.slane %v50, 2
    %v52 = vadd.f32 %v50, %v51
    %v53 = vrot.slane %v52, 1
    %v54 = vadd.f32 %v52, %v53
    %v57 = vrot.slane %v37, 4
    %v58 = vrot.slane %v39, 4
    %v61 = vsel %vm40, %v57, 0.0
    %v62 = vrot.slane %v61, 4
    %v63 = vadd.f32 %v61, %v62
    %v64 = vrot.slane %v63, 2
    %v65 = vadd.f32 %v63, %v64
    %v66 = vrot.slane %v65, 1
    %v67 = vadd.f32 %v65, %v66
    %v68 = vsel %vm40, %v58, 0.0
    %v69 = vrot.slane %v68, 4
    %v70 = vadd.f32 %v68, %v69
    %v71 = vrot.slane %v70, 2
    %v72 = vadd.f32 %v70, %v71
    %v73 = vrot.slane %v72, 1
    %v74 = vadd.f32 %v72, %v73
    %vm75 = vcmask 1040384
    %v76 = vsel %vm75, %v47, %v67
    %v77 = vsel %vm75, %v54, %v74
    %v80 = vcombine.low %v76, %v77
    %v82 = vunpack.c.l.s4 1983009808
    %v83 = vunpack.c.0.s8 %v82
    %v84 = vlaneseq
    %v85 = vshrl.u32 %v84, 7
    %v86 = vsub.s32 %v83, %v85
    %v87 = vrot.slane %v80, %v86
    %89 = vst [vmem:[#allocation6] sm:$0xf] %v87
    // Predicated region
    $region10: #{tpu_custom_call.1} parent=1 // pred_check
      _
    $region11: #{tpu_custom_call.1} parent=1 // pred_check_branch
      %91 = sbr.rel (0) target = $region13
    $region12: #{tpu_custom_call.1} parent=1 // pred_region
      %s93 = ssub.s32 256, 256
      %94 = vsyncadd [#allocation4], %s93
      %s96 = sshll.u32 [#allocation5], 4
      %s97 = int_to_ptr.vmem [resolvable:$true] %s96
      %99 = dma.vmem_to_hbm [thread:$0]  %s97, 256, %s1, [#allocation4]
    $region13: #{tpu_custom_call.1} parent=1 // pred_fallthru
      _
    // Predicated region
    $region14: #{tpu_custom_call.1} parent=1 // pred_check
      _
    $region15: #{tpu_custom_call.1} parent=1 // pred_check_branch
      %101 = sbr.rel (0) target = $region17
    $region16: #{tpu_custom_call.1} parent=1 // pred_region
      %s103 = ssub.s32 64, 64
      %104 = vsyncadd [#allocation7], %s103
      %s106 = sshll.u32 [#allocation6], 4
      %s107 = int_to_ptr.vmem [resolvable:$true] %s106
      %109 = dma.vmem_to_hbm [thread:$0]  %s107, 64, %s2, [#allocation7]
    $region17: #{tpu_custom_call.1} parent=1 // pred_fallthru
      _
    // Predicated region
    $region18: #{tpu_custom_call.1} parent=1 // pred_check
      _
    $region19: #{tpu_custom_call.1} parent=1 // pred_check_branch
      %111 = sbr.rel (0) target = $region21
    $region20: #{tpu_custom_call.1} parent=1 // pred_region
      %112 = dma.done [#allocation4], 256
    $region21: #{tpu_custom_call.1} parent=1 // pred_fallthru
      _
    // Predicated region
    $region22: #{tpu_custom_call.1} parent=1 // pred_check
      _
    $region23: #{tpu_custom_call.1} parent=1 // pred_check_branch
      %114 = sbr.rel (0) target = $region25
    $region24: #{tpu_custom_call.1} parent=1 // pred_region
      %115 = dma.done [#allocation7], 64
    $region25: #{tpu_custom_call.1} parent=1 // pred_fallthru
      _
    %116 = vsyncpa [#allocation3], 1
    %117 = vsyncpa [#allocation4], 1
    %118 = vsyncpa [#allocation7], 1

</llo_original>
